<compile_context>
chip_gen: v5e
topology: v5e:2x2
jax: 0.10.0
libtpu: 0.0.40
codegen_flags: <defaults>
</compile_context>

<pallas_src>
import jax
import jax.numpy as jnp
from jax.experimental import pallas as pl
from jax.experimental.pallas import tpu as pltpu

_LANE = 128
_SUBLANE = 8
# Keep at least this many grid steps (when the array allows) so the DMA
# pipeline stays full and v7x can shard the parallel axis across both
# TensorCores without leaving one idle.
_MIN_GRID_STEPS = 8
# Never tile below 512 rows (256 KiB f32): smaller tiles spend the ~0.35 us
# per-step overhead on too little traffic.
_MIN_TILE_ROWS = 512
# Below this size a plain XLA multiply (fusable into producer/consumer ops)
# beats a pallas_call's launch + forced HBM round trip.
_PALLAS_MIN_BYTES = 512 * 1024


def _scale_kernel(scale_ref, x_ref, o_ref):
    # scale_ref is a (1, 1) scalar in SMEM, kept in the parameter's dtype
    # (f32). The multiply promotes x to the scale dtype -- matching PyTorch's
    # type promotion -- and the result is cast to the requested output dtype.
    o_ref[...] = (x_ref[...] * scale_ref[0, 0]).astype(o_ref.dtype)


def _chip_tiling_params():
    """Per-generation (max_tile_rows, vmem_limit_bytes) for f32 blocks."""
    kind = ""
    try:
        kind = jax.devices()[0].device_kind.lower()
    except Exception:  # no devices / unexpected backend: use the safe default
        pass
    if "v7" in kind or "7x" in kind:
        # v7x: ~3.2 TB/s per TC makes the ~0.35 us step overhead 20-30% of a
        # 2 MiB step; 8 MiB tiles amortize it to <10%. Double-buffered in+out
        # = 32 MiB, so raise the scoped-VMEM limit (64 MiB physical per TC).
        return 16384, 48 << 20
    if "v6" in kind:
        # v6e: 4 MiB tiles; 16 MiB double-buffered fits the 32 MiB default.
        return 8192, None
    # v5e (16 MiB default scoped VMEM) and unknown chips: 2 MiB tiles.
    return 4096, None


def _choose_tile_rows(rows, max_tile_rows):
    if rows <= _MIN_TILE_ROWS:
        # Single full-extent block (block shape == array shape, so no
        # sublane-divisibility constraint). Only hit by tiny/forced inputs.
        return rows
    # Aim for >= _MIN_GRID_STEPS blocks so the pipeline overlaps DMA and
    # compute; clamp to [512, per-chip max] and round to a sublane multiple.
    # The partial last block (if any) is masked by Pallas.
    target = -(-rows // _MIN_GRID_STEPS)
    target = -(-target // _SUBLANE) * _SUBLANE
    return max(_MIN_TILE_ROWS, min(max_tile_rows, target))


def scale_layer(x: jax.Array, scale: jax.Array, *, out_dtype=None,
                force_pallas: bool = False) -> jax.Array:
    """Equivalent of ScaleLayer.forward: returns x * scale (scalar parameter).

    out_dtype defaults to PyTorch-style type promotion; pass x.dtype to keep
    bf16 activations bf16 and halve writeback traffic (opt-in).
    """
    if out_dtype is None:
        out_dtype = jnp.promote_types(x.dtype, scale.dtype)

    total = x.size
    # Tiny activations: skip Pallas entirely; let XLA fuse the multiply.
    if not force_pallas and total * x.dtype.itemsize < _PALLAS_MIN_BYTES:
        return (x * scale).astype(out_dtype)

    orig_shape = x.shape
    x_flat = jnp.ravel(x)

    rem = total % _LANE
    main = total - rem
    if main == 0:
        # Smaller than one lane row: nothing for the kernel to do.
        return (x * scale).astype(out_dtype)

    # Lane-dense 2D slab over the 128-aligned prefix. The <128-element tail
    # (if any) is handled by a plain XLA multiply below instead of padding
    # and re-slicing the whole flat array (two extra HBM passes).
    x_main = x_flat[:main] if rem else x_flat
    rows = main // _LANE
    x2d = x_main.reshape(rows, _LANE)

    max_tile_rows, vmem_limit = _chip_tiling_params()
    tile_rows = _choose_tile_rows(rows, max_tile_rows)
    num_tiles = pl.cdiv(rows, tile_rows)

    scale_smem = jnp.reshape(scale, (1, 1))  # keep parameter dtype (f32)

    compiler_kwargs = dict(dimension_semantics=("parallel",))
    if vmem_limit is not None:
        compiler_kwargs["vmem_limit_bytes"] = vmem_limit

    bytes_accessed = (
        main * x.dtype.itemsize
        + main * jnp.dtype(out_dtype).itemsize
        + jnp.dtype(scale.dtype).itemsize
    )

    out2d = pl.pallas_call(
        _scale_kernel,
        out_shape=jax.ShapeDtypeStruct((rows, _LANE), out_dtype),
        grid=(num_tiles,),
        in_specs=[
            pl.BlockSpec(memory_space=pltpu.MemorySpace.SMEM),
            pl.BlockSpec((tile_rows, _LANE), lambda i: (i, 0)),
        ],
        out_specs=pl.BlockSpec((tile_rows, _LANE), lambda i: (i, 0)),
        compiler_params=pltpu.CompilerParams(**compiler_kwargs),
        # Advisory: tells XLA this custom call is memory-bound so surrounding
        # HLO (reshape/slice/concat) can be scheduled around it.
        cost_estimate=pl.CostEstimate(
            flops=main, transcendentals=0, bytes_accessed=bytes_accessed
        ),
    )(scale_smem, x2d)

    out_flat = out2d.reshape(-1)
    if rem:
        tail = (x_flat[main:] * scale).astype(out_dtype)
        out_flat = jnp.concatenate([out_flat, tail])
    return out_flat.reshape(orig_shape)


if __name__ == "__main__":
    key = jax.random.PRNGKey(0)
    k_x, k_s = jax.random.split(key)

    # NCHW activation consistent with ScaleLayer usage in the test.
    x = jax.random.normal(k_x, (2, 4, 16, 16), dtype=jnp.float32)
    # torch.rand(()) equivalent: scalar uniform in [0, 1), f32 parameter.
    scale = jax.random.uniform(k_s, (), dtype=jnp.float32)

    expected = x * scale

    # Exercise the Pallas kernel path on the small test input.
    out = jax.block_until_ready(scale_layer(x, scale, force_pallas=True))
    assert out.shape == x.shape and out.dtype == expected.dtype
    assert jnp.allclose(out, expected, rtol=1e-6, atol=1e-6)

    # Small-input fast path (plain XLA multiply).
    out_fast = jax.block_until_ready(scale_layer(x, scale))
    assert jnp.allclose(out_fast, expected, rtol=1e-6, atol=1e-6)

    # Misaligned total (not a multiple of 128): exercises the tail-peel path.
    x_odd = jax.random.normal(k_x, (2, 4, 17, 17), dtype=jnp.float32)
    out_odd = jax.block_until_ready(scale_layer(x_odd, scale, force_pallas=True))
    assert out_odd.shape == x_odd.shape
    assert jnp.allclose(out_odd, x_odd * scale, rtol=1e-6, atol=1e-6)

    print("KERNEL_OK")
</pallas_src>

<mosaic_0001>
module attributes {stable_mosaic.version = 11 : i64} {
  func.func @_scale_kernel(%arg0: i32, %arg1: memref<1x1xf32, #tpu.memory_space<smem>>, %arg2: memref<16x128xf32, #tpu.memory_space<vmem>>, %arg3: memref<16x128xf32, #tpu.memory_space<vmem>>) attributes {dimension_semantics = [#tpu.dimension_semantics<parallel>], iteration_bounds = array<i64: 1>, scalar_prefetch = 0 : i64, scratch_operands = 0 : i64, tpu.core_type = #tpu.core_type<tc>, window_params = [{transform_indices = @transform_0, window_bounds = array<i64: 1, 1>}, {transform_indices = @transform_1, window_bounds = array<i64: 16, 128>}, {transform_indices = @transform_2, window_bounds = array<i64: 16, 128>}]} {
    %c0 = arith.constant 0 : index
    %c0_0 = arith.constant 0 : index
    %0 = vector.load %arg2[%c0, %c0_0] : memref<16x128xf32, #tpu.memory_space<vmem>>, vector<16x128xf32>
    %c0_1 = arith.constant 0 : index
    %c0_2 = arith.constant 0 : index
    %1 = memref.load %arg1[%c0_1, %c0_2] : memref<1x1xf32, #tpu.memory_space<smem>>
    %2 = vector.broadcast %1 : f32 to vector<16x128xf32>
    %3 = arith.mulf %0, %2 : vector<16x128xf32>
    %c0_3 = arith.constant 0 : index
    %c0_4 = arith.constant 0 : index
    %4 = vector.load %arg3[%c0_3, %c0_4] : memref<16x128xf32, #tpu.memory_space<vmem>>, vector<16x128xf32>
    tpu.vector_store %arg3[%c0_3, %c0_4], %3 {strides = array<i32>} : memref<16x128xf32, #tpu.memory_space<vmem>>, vector<16x128xf32>,
    return
  }
  func.func @transform_0(%arg0: i32) -> (i32, i32) {
    %c0_i32 = arith.constant 0 : i32
    %c0_i32_0 = arith.constant 0 : i32
    %c0_i32_1 = arith.constant 0 : i32
    return %c0_i32, %c0_i32_0 : i32, i32
  }
  func.func @transform_1(%arg0: i32) -> (i32, i32) {
    %c0_i32 = arith.constant 0 : i32
    %c0_i32_0 = arith.constant 0 : i32
    return %arg0, %c0_i32 : i32, i32
  }
  func.func @transform_2(%arg0: i32) -> (i32, i32) {
    %c0_i32 = arith.constant 0 : i32
    %c0_i32_0 = arith.constant 0 : i32
    return %arg0, %c0_i32 : i32, i32
  }
}

</mosaic_0001>

<llo_original>
// kernel: tpu_custom_call.1
$region0: #{tpu_custom_call.1}
  #allocation0 [shape = 'u32[]', space=smem, size = 0x4, offset = 0x4, fixed_abs, tag = 'smem constant byte address 0x4 - core index']
  #allocation1 [shape = 'u32[72,128]{1,0:T(1,128)}', space=vmem, size = 0x9000, scoped, tag = 'internal scratch']
  #allocation2 [shape = 'f32[1,1]{1,0:T(1,128)S(6)}', space=smem, size = 0x200, scoped, tag = 'scoped memory for tpu_custom_call.1']
  %s0 = inlined_call_operand.<no memory space> [shape: f32[1,1], index: 0, kind: input, shape index: {}]
  %s1 = inlined_call_operand.hbm [shape: f32[16,128], index: 1, kind: input, shape index: {}]
  %s2 = inlined_call_operand.hbm [shape: f32[16,128], index: 2, kind: output, shape index: {}]
  %s3 = sld [smem:[#allocation0]]
  $region22: #{tpu_custom_call.1} parent=0
    _
  %s5 = ssub.s32 1, %s3
  %s6 = scalar_select 0, %s5, %s3
  %7 = sst [smem:[#allocation2]] %s0
  $region1: #{tpu_custom_call.1} parent=0
    #allocation3 [shape = 'u8[8192]{0}', space=vmem, size = 0x2000, scoped, tag = 'input window, operand 1, single buffered']
    #allocation4 [shape = 's32[1]{0}', space=sflag, size = 0x4, scoped, tag = 'scoped memory for tpu_custom_call.1']
    #allocation5 [shape = 's32[1]{0}', space=sflag, size = 0x4, scoped, tag = 'scoped memory for tpu_custom_call.1']
    #allocation6 [shape = 'u8[8192]{0}', space=vmem, size = 0x2000, scoped, tag = 'output window, operand 0, single buffered']
    %8 = vsyncpa [#allocation4], 0
    %9 = vsyncpa [#allocation5], 0
    // Predicated region
    $region2: #{tpu_custom_call.1} parent=1 // pred_check
      _
    $region3: #{tpu_custom_call.1} parent=1 // pred_check_branch
      %11 = sbr.rel (0) target = $region5
    $region4: #{tpu_custom_call.1} parent=1 // pred_region
      _
    $region5: #{tpu_custom_call.1} parent=1 // pred_fallthru
      _
    // Predicated region
    $region6: #{tpu_custom_call.1} parent=1 // pred_check
      _
    $region7: #{tpu_custom_call.1} parent=1 // pred_check_branch
      %13 = sbr.rel (0) target = $region9
    $region8: #{tpu_custom_call.1} parent=1 // pred_region
      %15 = vsyncadd [#allocation4], 0
      %s16 = sshll.u32 %s1, 4
      %s17 = int_to_ptr.hbm [resolvable:$true] %s16
      %s18 = sshll.u32 [#allocation3], 4
      %s19 = int_to_ptr.vmem [resolvable:$true] %s18
      %24 = dma.hbm_to_vmem [thread:$0]  %s17, 256, %s19, [#allocation4], 128, 128, 8
    $region9: #{tpu_custom_call.1} parent=1 // pred_fallthru
      _
    // Predicated region
    $region10: #{tpu_custom_call.1} parent=1 // pred_check
      _
    $region11: #{tpu_custom_call.1} parent=1 // pred_check_branch
      %26 = sbr.rel (0) target = $region13
    $region12: #{tpu_custom_call.1} parent=1 // pred_region
      %28 = dma.done [#allocation4], 256
    $region13: #{tpu_custom_call.1} parent=1 // pred_fallthru
      _
    %v29 = vld [vmem:[#allocation3] sm:$0xff]
    %v30 = vld [vmem:[#allocation3 + $0x8] sm:$0xff]
    %s31 = sld [smem:[#allocation2]]
    %v32 = vstv %s31
    %v33 = vmul.f32 %v29, %v32
    %v34 = vmul.f32 %v30, %v32
    %35 = vst [vmem:[#allocation6] sm:$0xff] %v33
    %36 = vst [vmem:[#allocation6 + $0x8] sm:$0xff] %v34
    // Predicated region
    $region14: #{tpu_custom_call.1} parent=1 // pred_check
      _
    $region15: #{tpu_custom_call.1} parent=1 // pred_check_branch
      %38 = sbr.rel (0) target = $region17
    $region16: #{tpu_custom_call.1} parent=1 // pred_region
      %40 = vsyncadd [#allocation5], 0
      %s41 = sshll.u32 [#allocation6], 4
      %s42 = int_to_ptr.vmem [resolvable:$true] %s41
      %s43 = sshll.u32 %s2, 4
      %s44 = int_to_ptr.hbm [resolvable:$true] %s43
      %49 = dma.vmem_to_hbm [thread:$0]  %s42, 256, %s44, [#allocation5], 128, 128, 8
    $region17: #{tpu_custom_call.1} parent=1 // pred_fallthru
      _
    // Predicated region
    $region18: #{tpu_custom_call.1} parent=1 // pred_check
      _
    $region19: #{tpu_custom_call.1} parent=1 // pred_check_branch
      %51 = sbr.rel (0) target = $region21
    $region20: #{tpu_custom_call.1} parent=1 // pred_region
      %53 = dma.done [#allocation5], 256
    $region21: #{tpu_custom_call.1} parent=1 // pred_fallthru
      _
    %54 = vsyncpa [#allocation4], 1
    %55 = vsyncpa [#allocation5], 1

</llo_original>
